<compile_context>
chip_gen: v7x
topology: tpu7x:2x2x1
jax: 0.10.0
libtpu: 0.0.40
codegen_flags: <defaults>
</compile_context>

<pallas_src>
import jax
import jax.numpy as jnp
from jax.experimental import pallas as pl
from jax.experimental.pallas import tpu as pltpu


def _copy_kernel(x_ref, o_ref):
    # Pure pass-through of the current (block_rows, lanes) tile.
    o_ref[...] = x_ref[...]


# Lane widths tried in order (all multiples of 128 -> unmasked, lane-dense vst).
_LANE_CHOICES = (1024, 896, 768, 640, 512, 384, 256, 128)
_MAX_BLOCK_ROWS = 1024            # 1024 x 1024 f32 = 4 MiB per block
_VMEM_LIMIT_BYTES = 32 * 1024 * 1024   # safe on v5e/v6e (128 MiB) and v7x (64 MiB)
_MIN_KERNEL_ELEMS = 2048          # below this, launch overhead dominates -> return x


def _round_up(v: int, m: int) -> int:
    return ((v + m - 1) // m) * m


def neural_network_forward(x: jax.Array) -> jax.Array:
    """Forward pass of the (abstract) NeuralNetwork base class.

    Semantically identity.  Implemented as a lane-dense, large-block Pallas
    streaming copy (near HBM roofline); degenerate cases (tiny tensors, sizes
    not divisible by 128) return x directly with zero HBM traffic.
    """
    total = int(x.size)
    itemsize = jnp.dtype(x.dtype).itemsize

    # ---- zero-cost fast paths (identity needs no data movement) -------------
    if total == 0 or total < _MIN_KERNEL_ELEMS or total % 128 != 0:
        # Either too small to amortize kernel-launch overhead, or a lane-dense
        # reshape would require padding (which would triple HBM bytes moved).
        return x

    # ---- pick a lane width that exactly divides the element count -----------
    lanes = 128
    for cand in _LANE_CHOICES:
        if total % cand == 0:
            lanes = cand
            break
    rows = total // lanes

    # Sublane granularity from dtype packing (f32 -> 8, bf16 -> 16, i8 -> 32).
    sublane = max(8, 32 // max(1, itemsize))

    # ---- block_rows: big blocks, but keep >= 2 grid steps for v7x dual-TC ----
    if rows <= 2 * sublane:
        # Tiny row count: single block equal to the full array dims (allowed
        # even when rows is not a multiple of the sublane granularity).
        block_rows = rows
        grid_rows = 1
    else:
        target = _round_up(pl.cdiv(rows, 2), sublane)   # aim for >= 2 grid steps
        block_rows = max(sublane, min(_MAX_BLOCK_ROWS, target))
        grid_rows = pl.cdiv(rows, block_rows)           # ragged tail masked by Pallas

    # Wrapper-side reshape to a lane-dense 2D slab (no pad, no extra HBM pass).
    flat2d = x.reshape(rows, lanes)

    out = pl.pallas_call(
        _copy_kernel,
        out_shape=jax.ShapeDtypeStruct((rows, lanes), x.dtype),
        grid_spec=pltpu.PrefetchScalarGridSpec(
            num_scalar_prefetch=0,
            grid=(grid_rows,),
            in_specs=[pl.BlockSpec((block_rows, lanes), lambda i: (i, 0))],
            out_specs=pl.BlockSpec((block_rows, lanes), lambda i: (i, 0)),
        ),
        compiler_params=pltpu.CompilerParams(
            dimension_semantics=("parallel",),
            vmem_limit_bytes=_VMEM_LIMIT_BYTES,
        ),
        cost_estimate=pl.CostEstimate(
            flops=0,
            transcendentals=0,
            bytes_accessed=2 * rows * lanes * itemsize,
        ),
        # Identity copy with identical in/out index maps -> safe to reuse the
        # (temporary) input HBM buffer for the output.
        input_output_aliases={0: 0},
    )(flat2d)

    return out.reshape(x.shape)


if __name__ == "__main__":
    key = jax.random.PRNGKey(0)
    k1, k2, k3 = jax.random.split(key, 3)

    # Canonical small NCHW input (2*4*16*16 = 2048 elems -> exercises the
    # Pallas copy path with a single full-array block).
    x = jax.random.normal(k1, (2, 4, 16, 16), dtype=jnp.float32)
    y = jax.block_until_ready(neural_network_forward(x))
    assert y.shape == x.shape and y.dtype == x.dtype
    assert bool(jnp.array_equal(y, x))

    # Multi-block path (256 KiB): 2-step "parallel" grid (both v7x TCs busy).
    x2 = jax.random.normal(k2, (4, 8, 64, 128), dtype=jnp.float32)
    y2 = jax.block_until_ready(neural_network_forward(x2))
    assert y2.shape == x2.shape and bool(jnp.array_equal(y2, x2))

    # Non-128-divisible element count -> zero-cost identity fast path
    # (no pad / extra HBM passes, per the performance review).
    x3 = jax.random.normal(k3, (3, 5, 7), dtype=jnp.float32)
    y3 = jax.block_until_ready(neural_network_forward(x3))
    assert y3.shape == x3.shape and bool(jnp.array_equal(y3, x3))

    print("KERNEL_OK")
</pallas_src>

<mosaic_0001>
module attributes {stable_mosaic.version = 11 : i64} {
  func.func @_copy_kernel(%arg0: i32, %arg1: memref<2x1024xf32, #tpu.memory_space<vmem>>, %arg2: memref<2x1024xf32, #tpu.memory_space<vmem>>) attributes {dimension_semantics = [#tpu.dimension_semantics<parallel>], iteration_bounds = array<i64: 1>, scalar_prefetch = 0 : i64, scratch_operands = 0 : i64, tpu.core_type = #tpu.core_type<tc>, window_params = [{transform_indices = @transform_0, window_bounds = array<i64: 2, 1024>}, {transform_indices = @transform_1, window_bounds = array<i64: 2, 1024>}]} {
    %c0 = arith.constant 0 : index
    %c0_0 = arith.constant 0 : index
    %0 = vector.load %arg1[%c0, %c0_0] : memref<2x1024xf32, #tpu.memory_space<vmem>>, vector<2x1024xf32>
    %c0_1 = arith.constant 0 : index
    %c0_2 = arith.constant 0 : index
    %1 = vector.load %arg2[%c0_1, %c0_2] : memref<2x1024xf32, #tpu.memory_space<vmem>>, vector<2x1024xf32>
    tpu.vector_store %arg2[%c0_1, %c0_2], %0 {strides = array<i32>} : memref<2x1024xf32, #tpu.memory_space<vmem>>, vector<2x1024xf32>,
    return
  }
  func.func @transform_0(%arg0: i32) -> (i32, i32) {
    %c0_i32 = arith.constant 0 : i32
    %c0_i32_0 = arith.constant 0 : i32
    return %arg0, %c0_i32 : i32, i32
  }
  func.func @transform_1(%arg0: i32) -> (i32, i32) {
    %c0_i32 = arith.constant 0 : i32
    %c0_i32_0 = arith.constant 0 : i32
    return %arg0, %c0_i32 : i32, i32
  }
}

</mosaic_0001>

<llo_original>
// kernel: tpu_custom_call.1
$region0: #{tpu_custom_call.1}
  #allocation0 [shape = 'u32[]', space=smem, size = 0x4, offset = 0x4, fixed_abs, tag = 'smem constant byte address 0x4 - core index']
  #allocation1 [shape = 'u32[144,128]{1,0:T(1,128)}', space=vmem, size = 0x12000, scoped, tag = 'internal scratch']
  %s0 = inlined_call_operand.hbm [shape: f32[2,1024], index: 0, kind: input, shape index: {}, may-alias: {0,1}]
  %s1 = inlined_call_operand.hbm [shape: f32[2,1024], index: 1, kind: output, shape index: {}, may-alias: {0,1}]
  %s2 = sld [smem:[#allocation0]]
  $region18: #{tpu_custom_call.1} parent=0
    _
  %s4 = ssub.s32 1, %s2
  %s5 = scalar_select 0, %s4, %s2
  $region1: #{tpu_custom_call.1} parent=0
    #allocation2 [shape = 'u8[8192]{0}', space=vmem, size = 0x2000, scoped, tag = 'input window, operand 0, single buffered']
    #allocation3 [shape = 's32[1]{0}', space=sflag, size = 0x4, scoped, tag = 'scoped memory for tpu_custom_call.1']
    #allocation4 [shape = 's32[1]{0}', space=sflag, size = 0x4, scoped, tag = 'scoped memory for tpu_custom_call.1']
    #allocation5 [shape = 'u8[8192]{0}', space=vmem, size = 0x2000, scoped, tag = 'output window, operand 0, single buffered']
    %6 = vsyncpa [#allocation3], 0
    %7 = vsyncpa [#allocation4], 0
    // Predicated region
    $region2: #{tpu_custom_call.1} parent=1 // pred_check
      _
    $region3: #{tpu_custom_call.1} parent=1 // pred_check_branch
      %9 = sbr.rel (0) target = $region5
    $region4: #{tpu_custom_call.1} parent=1 // pred_region
      %s11 = ssub.s32 256, 256
      %12 = vsyncadd [#allocation3], %s11
      %s14 = sshll.u32 [#allocation2], 4
      %s15 = int_to_ptr.vmem [resolvable:$true] %s14
      %17 = dma.hbm_to_vmem [thread:$0]  %s0, 256, %s15, [#allocation3]
    $region5: #{tpu_custom_call.1} parent=1 // pred_fallthru
      _
    // Predicated region
    $region6: #{tpu_custom_call.1} parent=1 // pred_check
      _
    $region7: #{tpu_custom_call.1} parent=1 // pred_check_branch
      %19 = sbr.rel (0) target = $region9
    $region8: #{tpu_custom_call.1} parent=1 // pred_region
      %20 = dma.done [#allocation3], 256
    $region9: #{tpu_custom_call.1} parent=1 // pred_fallthru
      _
    %v21 = vld [vmem:[#allocation2] sm:$0xff]
    %v22 = vld [vmem:[#allocation2 + $0x8] sm:$0xff]
    %23 = vst [vmem:[#allocation5] sm:$0xff] %v21
    %24 = vst [vmem:[#allocation5 + $0x8] sm:$0xff] %v22
    // Predicated region
    $region10: #{tpu_custom_call.1} parent=1 // pred_check
      _
    $region11: #{tpu_custom_call.1} parent=1 // pred_check_branch
      %26 = sbr.rel (0) target = $region13
    $region12: #{tpu_custom_call.1} parent=1 // pred_region
      %s28 = ssub.s32 256, 256
      %29 = vsyncadd [#allocation4], %s28
      %s31 = sshll.u32 [#allocation5], 4
      %s32 = int_to_ptr.vmem [resolvable:$true] %s31
      %34 = dma.vmem_to_hbm [thread:$0]  %s32, 256, %s1, [#allocation4]
    $region13: #{tpu_custom_call.1} parent=1 // pred_fallthru
      _
    // Predicated region
    $region14: #{tpu_custom_call.1} parent=1 // pred_check
      _
    $region15: #{tpu_custom_call.1} parent=1 // pred_check_branch
      %36 = sbr.rel (0) target = $region17
    $region16: #{tpu_custom_call.1} parent=1 // pred_region
      %37 = dma.done [#allocation4], 256
    $region17: #{tpu_custom_call.1} parent=1 // pred_fallthru
      _
    %38 = vsyncpa [#allocation3], 1
    %39 = vsyncpa [#allocation4], 1

</llo_original>
